<compile_context>
chip_gen: v6e
topology: v6e:2x2x1
jax: 0.10.0
libtpu: 0.0.40
codegen_flags: <defaults>
</compile_context>

<pallas_src>
import math
import operator
from functools import partial, reduce

import jax
import jax.numpy as jnp
from jax.experimental import pallas as pl
from jax.experimental.pallas import tpu as pltpu


def _round_up(x, m):
    return (x + m - 1) // m * m


# --------------------------------------------------------------------------
# Kernel
# --------------------------------------------------------------------------
def _code_bilinear_kernel(x1_ref, x2_ref, w_ref, b_ref, o_ref, *, in1,
                          compute_dtype):
    """One M-tile: y = x1 @ W[:in1] + x2 @ W[in1:] + bias.

    Static sublane views of the resident packed weight (no scratch, no
    concat copy). f32 MXU accumulation, bias add in f32, cast on the store.
    Padded rows of a ragged last block are masked on writeback -> harmless.
    """
    x1 = x1_ref[...]
    x2 = x2_ref[...]
    w1 = w_ref[:in1, :]
    w2 = w_ref[in1:, :]
    if compute_dtype is not None:
        # Cast at the matmul operands instead of in the wrapper: avoids an
        # extra un-fused HBM pass over x1/x2 (read f32 + write bf16 + reread).
        x1 = x1.astype(compute_dtype)
        x2 = x2.astype(compute_dtype)
        w1 = w1.astype(compute_dtype)
        w2 = w2.astype(compute_dtype)
    y = jnp.dot(x1, w1, preferred_element_type=jnp.float32)
    y = y + jnp.dot(x2, w2, preferred_element_type=jnp.float32)
    o_ref[...] = (y + b_ref[...]).astype(o_ref.dtype)


# --------------------------------------------------------------------------
# Parameter prep (hoist out of the hot path)
# --------------------------------------------------------------------------
def pack_code_bilinear_weights(weights1, weights2, compute_dtype=None):
    """One-time prep: (out, in1), (out, in2) -> (in1+in2, out).

    Do this once at parameter-load time so the per-call path pays no
    transpose / concat HBM traffic. Pass compute_dtype=jnp.bfloat16 to store
    the packed weight in bf16 for the reduced-precision matmul path.
    """
    w = jnp.concatenate([weights1.T, weights2.T], axis=0)
    if compute_dtype is not None:
        w = w.astype(compute_dtype)
    return w


# --------------------------------------------------------------------------
# Generation-aware tiling policy
# --------------------------------------------------------------------------
def _generation_policy():
    """Best-effort generation awareness via VMEM capacity.

    v7x: 64 MiB VMEM/TC and 2 TensorCores share the 'parallel' grid axis ->
         smaller budget, prefer even grid_m >= 8 so each TC gets >= 4 steps.
    v5e/v6e: 128 MiB VMEM, 1 TC -> larger budget, grid_m >= 4 for overlap.
    """
    vmem_cap = 128 << 20
    try:
        info = pltpu.get_tpu_info()
        vmem_cap = int(getattr(info, "vmem_capacity_bytes", vmem_cap))
    except Exception:
        pass
    if vmem_cap <= (64 << 20):
        return dict(vmem_budget=40 << 20, vmem_limit=48 << 20,
                    min_blocks=8, even_blocks=True)
    return dict(vmem_budget=48 << 20, vmem_limit=64 << 20,
                min_blocks=4, even_blocks=False)


def _choose_tile_m(M, tile_m, in1, in2, out, x1_bytes, x2_bytes, o_bytes,
                   w_bytes, vmem_budget, min_blocks):
    """Pick an M-tile: 8-sublane aligned, as large as the VMEM budget allows,
    but capped so the grid has >= min_blocks steps (steady-state pipeline
    overlap / cross-TC sharding) whenever M is large enough for that."""
    k = in1 + in2
    fixed = k * out * w_bytes + out * 4                      # resident W + bias
    per_row = 2 * (in1 * x1_bytes + in2 * x2_bytes + out * o_bytes)  # dbl-buf

    tm = _round_up(max(tile_m, 8), 8)
    cap = (M // min_blocks) // 8 * 8                         # grid_m >= min_blocks
    if cap >= 8:
        tm = min(tm, cap)
    while tm > 8 and fixed + tm * per_row > vmem_budget:
        tm = max(8, (tm // 2) // 8 * 8)
    if tm >= M:
        return M   # single full-extent block (always a legal block shape)
    return tm


# --------------------------------------------------------------------------
# Wrappers
# --------------------------------------------------------------------------
def code_bilinear_packed(x1, x2, w_packed, bias, *, tile_m=4096,
                         compute_dtype=None):
    """Pallas CodeBilinear forward with pre-packed weights.

    x1: (..., in1), x2: (..., in2) with identical leading dims.
    w_packed: (in1+in2, out) from pack_code_bilinear_weights, bias: (out,).
    Returns (..., out) in x1.dtype.
    """
    assert x1.shape[:-1] == x2.shape[:-1], "leading dims must match"
    lead = x1.shape[:-1]
    in1, in2 = x1.shape[-1], x2.shape[-1]
    k = in1 + in2
    out = w_packed.shape[1]
    assert w_packed.shape == (k, out)
    assert bias.shape == (out,)

    out_dtype = x1.dtype
    M = reduce(operator.mul, lead, 1)
    # Row-major flatten: free for contiguous producers; a transposed /
    # non-contiguous producer would pay a hidden XLA copy here (perf hazard).
    x1f = x1.reshape(M, in1)
    x2f = x2.reshape(M, in2)
    # NOTE: no activation cast here — compute_dtype cast happens in-kernel.
    b2d = bias.astype(jnp.float32).reshape(1, out)

    x1_bytes = jnp.dtype(x1f.dtype).itemsize
    x2_bytes = jnp.dtype(x2f.dtype).itemsize
    o_bytes = jnp.dtype(out_dtype).itemsize
    w_bytes = jnp.dtype(w_packed.dtype).itemsize

    policy = _generation_policy()
    tm = _choose_tile_m(M, tile_m, in1, in2, out, x1_bytes, x2_bytes,
                        o_bytes, w_bytes, policy["vmem_budget"],
                        policy["min_blocks"])
    grid_m = pl.cdiv(M, tm)
    # v7x: best-effort even grid_m so both TensorCores get equal work.
    if policy["even_blocks"] and grid_m > 1 and grid_m % 2 == 1:
        cand = max(8, _round_up(pl.cdiv(M, grid_m + 1), 8))
        if cand < M and pl.cdiv(M, cand) % 2 == 0:
            tm, grid_m = cand, pl.cdiv(M, cand)

    cost = pl.CostEstimate(
        flops=2 * M * k * out,
        transcendentals=0,
        bytes_accessed=(M * (in1 * x1_bytes + in2 * x2_bytes)
                        + M * out * o_bytes + k * out * w_bytes + out * 4),
    )

    kernel = partial(_code_bilinear_kernel, in1=in1,
                     compute_dtype=compute_dtype)

    def _run(single_buffer_resident):
        res_kw = ({"pipeline_mode": pl.Buffered(1)}
                  if single_buffer_resident else {})
        grid_spec = pltpu.PrefetchScalarGridSpec(
            num_scalar_prefetch=0,
            grid=(grid_m,),
            in_specs=[
                pl.BlockSpec((tm, in1), lambda i: (i, 0)),
                pl.BlockSpec((tm, in2), lambda i: (i, 0)),
                pl.BlockSpec((k, out), lambda i: (0, 0), **res_kw),   # resident W
                pl.BlockSpec((1, out), lambda i: (0, 0), **res_kw),   # resident b
            ],
            out_specs=pl.BlockSpec((tm, out), lambda i: (i, 0)),
        )
        return pl.pallas_call(
            kernel,
            out_shape=jax.ShapeDtypeStruct((M, out), out_dtype),
            grid_spec=grid_spec,
            compiler_params=pltpu.CompilerParams(
                dimension_semantics=("parallel",),
                vmem_limit_bytes=policy["vmem_limit"]),
            cost_estimate=cost,
        )(x1f, x2f, w_packed, b2d)

    try:
        out_flat = _run(True)    # single-buffer the grid-invariant W / bias
    except Exception:
        out_flat = _run(False)   # fallback if Buffered(1) is unsupported

    return out_flat.reshape(*lead, out)


def code_bilinear(x1, x2, weights1, weights2, bias, *, tile_m=4096,
                  compute_dtype=None):
    """Convenience entry taking PyTorch-layout weights (out, in).

    For repeated calls, call pack_code_bilinear_weights once and use
    code_bilinear_packed directly so weight transpose/concat is hoisted.
    """
    w_packed = pack_code_bilinear_weights(weights1, weights2, compute_dtype)
    return code_bilinear_packed(x1, x2, w_packed, bias, tile_m=tile_m,
                                compute_dtype=compute_dtype)


def init_code_bilinear_params(key, in1_features, in2_features, out_features,
                              dtype=jnp.float32):
    """Mimics the PyTorch module's reset_parameters (kaiming_uniform a=sqrt(5)
    on (out, fan_in) weights = U(-1/sqrt(fan_in), 1/sqrt(fan_in));
    bias = U(-1/sqrt(in1), 1/sqrt(in1)))."""
    k1, k2, k3 = jax.random.split(key, 3)
    b1 = 1.0 / math.sqrt(in1_features)
    b2 = 1.0 / math.sqrt(in2_features)
    weights1 = jax.random.uniform(k1, (out_features, in1_features),
                                  dtype=dtype, minval=-b1, maxval=b1)
    weights2 = jax.random.uniform(k2, (out_features, in2_features),
                                  dtype=dtype, minval=-b2, maxval=b2)
    bias = jax.random.uniform(k3, (out_features,), dtype=dtype,
                              minval=-b1, maxval=b1)
    return weights1, weights2, bias


if __name__ == "__main__":
    key = jax.random.PRNGKey(0)
    kx1, kx2, kp = jax.random.split(key, 3)

    # Small shapes consistent with the module: batch=2, seq=8, in1=32, in2=16, out=64.
    batch, seq = 2, 8
    in1_features, in2_features, out_features = 32, 16, 64

    x1 = jax.random.normal(kx1, (batch, seq, in1_features), dtype=jnp.float32)
    x2 = jax.random.normal(kx2, (batch, seq, in2_features), dtype=jnp.float32)
    w1, w2, b = init_code_bilinear_params(kp, in1_features, in2_features,
                                          out_features)

    # f32 path.
    y = jax.block_until_ready(code_bilinear(x1, x2, w1, w2, b))
    y_ref = x1 @ w1.T + x2 @ w2.T + b
    assert y.shape == (batch, seq, out_features)
    assert jnp.allclose(y, y_ref, atol=1e-5, rtol=1e-5), "mismatch vs reference"

    # Ragged grid: M = 3*70 = 210 with small tile_m -> partial last block.
    kx3, kx4 = jax.random.split(kx1)
    x1b = jax.random.normal(kx3, (3, 70, in1_features), dtype=jnp.float32)
    x2b = jax.random.normal(kx4, (3, 70, in2_features), dtype=jnp.float32)
    yb = jax.block_until_ready(code_bilinear(x1b, x2b, w1, w2, b, tile_m=64))
    yb_ref = x1b @ w1.T + x2b @ w2.T + b
    assert jnp.allclose(yb, yb_ref, atol=1e-5, rtol=1e-5), "ragged mismatch"

    # bf16 matmul path (bandwidth / MXU optimization): cast happens IN-KERNEL,
    # f32 accumulation and bias add.
    ybf = jax.block_until_ready(
        code_bilinear(x1, x2, w1, w2, b, compute_dtype=jnp.bfloat16))
    assert jnp.allclose(ybf.astype(jnp.float32), y_ref, atol=5e-2, rtol=5e-2), \
        "bf16 path mismatch"

    print("KERNEL_OK")
</pallas_src>

<mosaic_0001>
module attributes {stable_mosaic.version = 11 : i64} {
  func.func @_code_bilinear_kernel(%arg0: i32, %arg1: memref<16x32xf32, #tpu.memory_space<vmem>>, %arg2: memref<16x16xf32, #tpu.memory_space<vmem>>, %arg3: memref<48x64xf32, #tpu.memory_space<vmem>>, %arg4: memref<1x64xf32, #tpu.memory_space<vmem>>, %arg5: memref<16x64xf32, #tpu.memory_space<vmem>>) attributes {dimension_semantics = [#tpu.dimension_semantics<parallel>], iteration_bounds = array<i64: 1>, scalar_prefetch = 0 : i64, scratch_operands = 0 : i64, tpu.core_type = #tpu.core_type<tc>, window_params = [{transform_indices = @transform_0, window_bounds = array<i64: 16, 32>}, {transform_indices = @transform_1, window_bounds = array<i64: 16, 16>}, {pipeline_mode = #tpu.pipeline_mode<synchronous>, transform_indices = @transform_2, window_bounds = array<i64: 48, 64>}, {pipeline_mode = #tpu.pipeline_mode<synchronous>, transform_indices = @transform_3, window_bounds = array<i64: 1, 64>}, {transform_indices = @transform_4, window_bounds = array<i64: 16, 64>}]} {
    %c0 = arith.constant 0 : index
    %c0_0 = arith.constant 0 : index
    %0 = vector.load %arg1[%c0, %c0_0] : memref<16x32xf32, #tpu.memory_space<vmem>>, vector<16x32xf32>
    %c0_1 = arith.constant 0 : index
    %c0_2 = arith.constant 0 : index
    %1 = vector.load %arg2[%c0_1, %c0_2] : memref<16x16xf32, #tpu.memory_space<vmem>>, vector<16x16xf32>
    %c0_3 = arith.constant 0 : index
    %c0_4 = arith.constant 0 : index
    %2 = vector.load %arg3[%c0_3, %c0_4] : memref<48x64xf32, #tpu.memory_space<vmem>>, vector<32x64xf32>
    %c32 = arith.constant 32 : index
    %c0_5 = arith.constant 0 : index
    %3 = vector.load %arg3[%c32, %c0_5] : memref<48x64xf32, #tpu.memory_space<vmem>>, vector<16x64xf32>
    %cst = arith.constant dense<0.000000e+00> : vector<16x64xf32>
    %4 = tpu.matmul %0, %2, %cst {dimension_numbers = #tpu.dot_dimension_numbers<[1], [0], [0], [1], [0, 0, 1, 1], [], []>} : vector<16x32xf32>, vector<32x64xf32>, vector<16x64xf32> -> vector<16x64xf32>
    %cst_6 = arith.constant dense<0.000000e+00> : vector<16x64xf32>
    %5 = tpu.matmul %1, %3, %cst_6 {dimension_numbers = #tpu.dot_dimension_numbers<[1], [0], [0], [1], [0, 0, 1, 1], [], []>} : vector<16x16xf32>, vector<16x64xf32>, vector<16x64xf32> -> vector<16x64xf32>
    %6 = arith.addf %4, %5 : vector<16x64xf32>
    %c0_7 = arith.constant 0 : index
    %c0_8 = arith.constant 0 : index
    %7 = vector.load %arg4[%c0_7, %c0_8] : memref<1x64xf32, #tpu.memory_space<vmem>>, vector<1x64xf32>
    %8 = vector.broadcast %7 : vector<1x64xf32> to vector<16x64xf32>
    %9 = arith.addf %6, %8 : vector<16x64xf32>
    %c0_9 = arith.constant 0 : index
    %c0_10 = arith.constant 0 : index
    %10 = vector.load %arg5[%c0_9, %c0_10] : memref<16x64xf32, #tpu.memory_space<vmem>>, vector<16x64xf32>
    tpu.vector_store %arg5[%c0_9, %c0_10], %9 {strides = array<i32>} : memref<16x64xf32, #tpu.memory_space<vmem>>, vector<16x64xf32>,
    return
  }
  func.func @transform_0(%arg0: i32) -> (i32, i32) {
    %c0_i32 = arith.constant 0 : i32
    %c0_i32_0 = arith.constant 0 : i32
    return %arg0, %c0_i32 : i32, i32
  }
  func.func @transform_1(%arg0: i32) -> (i32, i32) {
    %c0_i32 = arith.constant 0 : i32
    %c0_i32_0 = arith.constant 0 : i32
    return %arg0, %c0_i32 : i32, i32
  }
  func.func @transform_2(%arg0: i32) -> (i32, i32) {
    %c0_i32 = arith.constant 0 : i32
    %c0_i32_0 = arith.constant 0 : i32
    %c0_i32_1 = arith.constant 0 : i32
    return %c0_i32, %c0_i32_0 : i32, i32
  }
  func.func @transform_3(%arg0: i32) -> (i32, i32) {
    %c0_i32 = arith.constant 0 : i32
    %c0_i32_0 = arith.constant 0 : i32
    %c0_i32_1 = arith.constant 0 : i32
    return %c0_i32, %c0_i32_0 : i32, i32
  }
  func.func @transform_4(%arg0: i32) -> (i32, i32) {
    %c0_i32 = arith.constant 0 : i32
    %c0_i32_0 = arith.constant 0 : i32
    return %arg0, %c0_i32 : i32, i32
  }
}

module attributes {stable_mosaic.version = 11 : i64} {
  func.func @_code_bilinear_kernel(%arg0: i32, %arg1: memref<16x32xf32, #tpu.memory_space<vmem>>, %arg2: memref<16x16xf32, #tpu.memory_space<vmem>>, %arg3: memref<48x64xf32, #tpu.memory_space<vmem>>, %arg4: memref<1x64xf32, #tpu.memory_space<vmem>>, %arg5: memref<16x64xf32, #tpu.memory_space<vmem>>) attributes {dimension_semantics = [#tpu.dimension_semantics<parallel>], iteration_bounds = array<i64: 1>, scalar_prefetch = 0 : i64, scratch_operands = 0 : i64, tpu.core_type = #tpu.core_type<tc>, window_params = [{transform_indices = @transform_0, window_bounds = array<i64: 16, 32>}, {transform_indices = @transform_1, window_bounds = array<i64: 16, 16>}, {pipeline_mode = #tpu.pipeline_mode<synchronous>, transform_indices = @transform_2, window_bounds = array<i64: 48, 64>}, {pipeline_mode = #tpu.pipeline_mode<synchronous>, transform_indices = @transform_3, window_bounds = array<i64: 1, 64>}, {transform_indices = @transform_4, window_bounds = array<i64: 16, 64>}]} {
    %c0 = arith.constant 0 : index
    %c0_0 = arith.constant 0 : index
    %0 = vector.load %arg1[%c0, %c0_0] : memref<16x32xf32, #tpu.memory_space<vmem>>, vector<16x32xf32>
    %c0_1 = arith.constant 0 : index
    %c0_2 = arith.constant 0 : index
    %1 = vector.load %arg2[%c0_1, %c0_2] : memref<16x16xf32, #tpu.memory_space<vmem>>, vector<16x16xf32>
    %c0_3 = arith.constant 0 : index
    %c0_4 = arith.constant 0 : index
    %2 = vector.load %arg3[%c0_3, %c0_4] : memref<48x64xf32, #tpu.memory_space<vmem>>, vector<32x64xf32>
    %c32 = arith.constant 32 : index
    %c0_5 = arith.constant 0 : index
    %3 = vector.load %arg3[%c32, %c0_5] : memref<48x64xf32, #tpu.memory_space<vmem>>, vector<16x64xf32>
    %cst = arith.constant dense<0.000000e+00> : vector<16x64xf32>
    %4 = tpu.matmul %0, %2, %cst {dimension_numbers = #tpu.dot_dimension_numbers<[1], [0], [0], [1], [0, 0, 1, 1], [], []>} : vector<16x32xf32>, vector<32x64xf32>, vector<16x64xf32> -> vector<16x64xf32>
    %cst_6 = arith.constant dense<0.000000e+00> : vector<16x64xf32>
    %5 = tpu.matmul %1, %3, %cst_6 {dimension_numbers = #tpu.dot_dimension_numbers<[1], [0], [0], [1], [0, 0, 1, 1], [], []>} : vector<16x16xf32>, vector<16x64xf32>, vector<16x64xf32> -> vector<16x64xf32>
    %6 = arith.addf %4, %5 : vector<16x64xf32>
    %c0_7 = arith.constant 0 : index
    %c0_8 = arith.constant 0 : index
    %7 = vector.load %arg4[%c0_7, %c0_8] : memref<1x64xf32, #tpu.memory_space<vmem>>, vector<1x64xf32>
    %8 = vector.broadcast %7 : vector<1x64xf32> to vector<16x64xf32>
    %9 = arith.addf %6, %8 : vector<16x64xf32>
    %c0_9 = arith.constant 0 : index
    %c0_10 = arith.constant 0 : index
    %10 = vector.load %arg5[%c0_9, %c0_10] : memref<16x64xf32, #tpu.memory_space<vmem>>, vector<16x64xf32>
    tpu.vector_store %arg5[%c0_9, %c0_10], %9 {strides = array<i32>} : memref<16x64xf32, #tpu.memory_space<vmem>>, vector<16x64xf32>,
    return
  }
  func.func @transform_0(%arg0: i32) -> (i32, i32) {
    %c0_i32 = arith.constant 0 : i32
    %c0_i32_0 = arith.constant 0 : i32
    return %arg0, %c0_i32 : i32, i32
  }
  func.func @transform_1(%arg0: i32) -> (i32, i32) {
    %c0_i32 = arith.constant 0 : i32
    %c0_i32_0 = arith.constant 0 : i32
    return %arg0, %c0_i32 : i32, i32
  }
  func.func @transform_2(%arg0: i32) -> (i32, i32) {
    %c0_i32 = arith.constant 0 : i32
    %c0_i32_0 = arith.constant 0 : i32
    %c0_i32_1 = arith.constant 0 : i32
    return %c0_i32, %c0_i32_0 : i32, i32
  }
  func.func @transform_3(%arg0: i32) -> (i32, i32) {
    %c0_i32 = arith.constant 0 : i32
    %c0_i32_0 = arith.constant 0 : i32
    %c0_i32_1 = arith.constant 0 : i32
    return %c0_i32, %c0_i32_0 : i32, i32
  }
  func.func @transform_4(%arg0: i32) -> (i32, i32) {
    %c0_i32 = arith.constant 0 : i32
    %c0_i32_0 = arith.constant 0 : i32
    return %arg0, %c0_i32 : i32, i32
  }
}

</mosaic_0001>

<llo_original>
// kernel: tpu_custom_call.1
$region0: #{tpu_custom_call.1}
  #allocation0 [shape = 'u32[]', space=smem, size = 0x4, offset = 0x4, fixed_abs, tag = 'smem constant byte address 0x4 - core index']
  #allocation1 [shape = 'u32[144,128]{1,0:T(1,128)}', space=vmem, size = 0x12000, scoped, tag = 'internal scratch']
  %s0 = inlined_call_operand.hbm [shape: f32[16,32], index: 0, kind: input, shape index: {}]
  %s1 = inlined_call_operand.hbm [shape: f32[16,16], index: 1, kind: input, shape index: {}]
  %s2 = inlined_call_operand.hbm [shape: f32[48,64], index: 2, kind: input, shape index: {}]
  %s3 = inlined_call_operand.vmem [shape: f32[1,64], index: 3, kind: input, shape index: {}]
  %s4 = inlined_call_operand.hbm [shape: f32[16,64], index: 4, kind: output, shape index: {}]
  %s5 = sld [smem:[#allocation0]]
  $region38: #{tpu_custom_call.1} parent=0
    _
  %s7 = ssub.s32 1, %s5
  %s8 = scalar_select 0, %s7, %s5
  $region1: #{tpu_custom_call.1} parent=0
    #allocation2 [shape = 'u8[8192]{0}', space=vmem, size = 0x2000, scoped, tag = 'input window, operand 0, single buffered']
    #allocation3 [shape = 's32[1]{0}', space=sflag, size = 0x4, scoped, tag = 'scoped memory for tpu_custom_call.1']
    #allocation4 [shape = 's32[1]{0}', space=sflag, size = 0x4, scoped, tag = 'scoped memory for tpu_custom_call.1']
    #allocation5 [shape = 'u8[8192]{0}', space=vmem, size = 0x2000, scoped, tag = 'input window, operand 1, single buffered']
    #allocation6 [shape = 's32[1]{0}', space=sflag, size = 0x4, scoped, tag = 'scoped memory for tpu_custom_call.1']
    #allocation7 [shape = 'u8[24576]{0}', space=vmem, size = 0x6000, scoped, tag = 'input window, operand 2, single buffered']
    #allocation8 [shape = 'u8[8192]{0}', space=vmem, size = 0x2000, scoped, tag = 'output window, operand 0, single buffered']
    %9 = vsyncpa [#allocation3], 0
    %10 = vsyncpa [#allocation6], 0
    %11 = vsyncpa [#allocation4], 0
    // Predicated region
    $region2: #{tpu_custom_call.1} parent=1 // pred_check
      _
    $region3: #{tpu_custom_call.1} parent=1 // pred_check_branch
      %13 = sbr.rel (0) target = $region5
    $region4: #{tpu_custom_call.1} parent=1 // pred_region
      %s15 = ssub.s32 256, 256
      %16 = vsyncadd [#allocation3], %s15
      %s17 = sshll.u32 [#allocation2], 4
      %s18 = int_to_ptr.vmem [resolvable:$true] %s17
      %23 = dma.hbm_to_vmem [thread:$0]  %s0, 256, %s18, [#allocation3], 128, 128, 8
    $region5: #{tpu_custom_call.1} parent=1 // pred_fallthru
      _
    // Predicated region
    $region6: #{tpu_custom_call.1} parent=1 // pred_check
      _
    $region7: #{tpu_custom_call.1} parent=1 // pred_check_branch
      %25 = sbr.rel (0) target = $region9
    $region8: #{tpu_custom_call.1} parent=1 // pred_region
      %s27 = ssub.s32 256, 256
      %28 = vsyncadd [#allocation6], %s27
      %s29 = sshll.u32 [#allocation5], 4
      %s30 = int_to_ptr.vmem [resolvable:$true] %s29
      %35 = dma.hbm_to_vmem [thread:$0]  %s1, 256, %s30, [#allocation6], 128, 128, 8
    $region9: #{tpu_custom_call.1} parent=1 // pred_fallthru
      _
    // Predicated region
    $region10: #{tpu_custom_call.1} parent=1 // pred_check
      _
    $region11: #{tpu_custom_call.1} parent=1 // pred_check_branch
      %37 = sbr.rel (0) target = $region13
    $region12: #{tpu_custom_call.1} parent=1 // pred_region
      %s39 = ssub.s32 768, 768
      %40 = vsyncadd [#allocation6], %s39
      %s41 = sshll.u32 [#allocation7], 4
      %s42 = int_to_ptr.vmem [resolvable:$true] %s41
      %47 = dma.hbm_to_vmem [thread:$0]  %s2, 768, %s42, [#allocation6], 128, 128, 8
    $region13: #{tpu_custom_call.1} parent=1 // pred_fallthru
      _
    // Predicated region
    $region14: #{tpu_custom_call.1} parent=1 // pred_check
      _
    $region15: #{tpu_custom_call.1} parent=1 // pred_check_branch
      %49 = sbr.rel (0) target = $region17
    $region16: #{tpu_custom_call.1} parent=1 // pred_region
      _
    $region17: #{tpu_custom_call.1} parent=1 // pred_fallthru
      _
    // Predicated region
    $region18: #{tpu_custom_call.1} parent=1 // pred_check
      _
    $region19: #{tpu_custom_call.1} parent=1 // pred_check_branch
      %51 = sbr.rel (0) target = $region21
    $region20: #{tpu_custom_call.1} parent=1 // pred_region
      %52 = dma.done [#allocation3], 256
    $region21: #{tpu_custom_call.1} parent=1 // pred_fallthru
      _
    // Predicated region
    $region22: #{tpu_custom_call.1} parent=1 // pred_check
      _
    $region23: #{tpu_custom_call.1} parent=1 // pred_check_branch
      %54 = sbr.rel (0) target = $region25
    $region24: #{tpu_custom_call.1} parent=1 // pred_region
      %55 = dma.done [#allocation6], 256
    $region25: #{tpu_custom_call.1} parent=1 // pred_fallthru
      _
    // Predicated region
    $region26: #{tpu_custom_call.1} parent=1 // pred_check
      _
    $region27: #{tpu_custom_call.1} parent=1 // pred_check_branch
      %57 = sbr.rel (0) target = $region29
    $region28: #{tpu_custom_call.1} parent=1 // pred_region
      %58 = dma.done [#allocation6], 768
    $region29: #{tpu_custom_call.1} parent=1 // pred_fallthru
      _
    %v59 = vld [vmem:[#allocation2] sm:$0xff]
    %v60 = vld [vmem:[#allocation2 + $0x8] sm:$0xff]
    %v61 = vld [vmem:[#allocation5] sm:$0xff]
    %v62 = vld [vmem:[#allocation5 + $0x8] sm:$0xff]
    %v63 = vld [vmem:[#allocation7] sm:$0xff]
    %v64 = vld [vmem:[#allocation7 + $0x8] sm:$0xff]
    %v65 = vld [vmem:[#allocation7 + $0x10] sm:$0xff]
    %v66 = vld [vmem:[#allocation7 + $0x18] sm:$0xff]
    %v67 = vld [vmem:[#allocation7 + $0x20] sm:$0xff]
    %v68 = vld [vmem:[#allocation7 + $0x28] sm:$0xff]
    %vm69 = vcmask 130048
    %v71 = vsel %vm69, %v61, 0
    %v74 = vsel %vm69, %v62, 0
    %76 = vmatprep.subr.mxu0 0.0
    %77 = vmatpush1.msra.mxu0 0.0
    %78 = vmatprep.subr.mxu0 0.0
    %79 = vmatpush1.msra.mxu0 0.0
    %80 = vmatprep.subr.mxu0 0.0
    %81 = vmatpush1.msra.mxu0 0.0
    %82 = vmatprep.subr.mxu0 0.0
    %83 = vmatpush1.msra.mxu0 0.0
    %84 = vmatprep.subr.mxu0 0.0
    %85 = vmatpush1.msra.mxu0 0.0
    %86 = vmatprep.subr.mxu0 0.0
    %87 = vmatpush1.msra.mxu0 0.0
    %88 = vmatprep.subr.mxu0 0.0
    %89 = vmatpush1.msra.mxu0 0.0
    %90 = vmatprep.subr.mxu0 0.0
    %91 = vmatpush1.msra.mxu0 0.0
    %92 = vmatprep.subr.mxu0 0.0
    %93 = vmatpush1.msra.mxu0 0.0
    %94 = vmatprep.subr.mxu0 0.0
    %95 = vmatpush1.msra.mxu0 0.0
    %96 = vmatprep.subr.mxu0 0.0
    %97 = vmatpush1.msra.mxu0 0.0
    %98 = vmatprep.subr.mxu0 0.0
    %99 = vmatpush1.msra.mxu0 0.0
    %100 = vmatprep.subr.mxu0 0.0
    %101 = vmatpush1.msra.mxu0 0.0
    %102 = vmatprep.subr.mxu0 0.0
    %103 = vmatpush1.msra.mxu0 0.0
    %104 = vmatprep.subr.mxu0 0.0
    %105 = vmatpush1.msra.mxu0 %v68
    %106 = vmatprep.subr.mxu0 0.0
    %107 = vmatpush1.msra.mxu0 %v67
    %108 = vmatprep.subr.mxu0 0.0
    %109 = vmatpush2.msra.mxu0 0.0
    %110 = vmatprep.subr.mxu0 0.0
    %111 = vmatpush2.msra.mxu0 0.0
    %112 = vmatprep.subr.mxu0 0.0
    %113 = vmatpush2.msra.mxu0 0.0
    %114 = vmatprep.subr.mxu0 0.0
    %115 = vmatpush2.msra.mxu0 0.0
    %116 = vmatprep.subr.mxu0 0.0
    %117 = vmatpush2.msra.mxu0 0.0
    %118 = vmatprep.subr.mxu0 0.0
    %119 = vmatpush2.msra.mxu0 0.0
    %120 = vmatprep.subr.mxu0 0.0
    %121 = vmatpush2.msra.mxu0 0.0
    %122 = vmatprep.subr.mxu0 0.0
    %123 = vmatpush2.msra.mxu0 0.0
    %124 = vmatprep.subr.mxu0 0.0
    %125 = vmatpush2.msra.mxu0 0.0
    %126 = vmatprep.subr.mxu0 0.0
    %127 = vmatpush2.msra.mxu0 0.0
    %128 = vmatprep.subr.mxu0 0.0
    %129 = vmatpush2.msra.mxu0 0.0
    %130 = vmatprep.subr.mxu0 0.0
    %131 = vmatpush2.msra.mxu0 0.0
    %132 = vmatprep.subr.mxu0 0.0
    %133 = vmatpush2.msra.mxu0 0.0
    %134 = vmatprep.subr.mxu0 0.0
    %135 = vmatpush2.msra.mxu0 0.0
    %136 = vmatprep.subr.mxu0 0.0
    %137 = vmatpush2.msra.mxu0 0.0
    %138 = vmatprep.subr.mxu0 0.0
    %139 = vmatpush2.msra.mxu0 0.0
    %140 = vmatprep.mubr.f32.mxu0 0.0
    %141 = vmatmul.mubr.f32.gmra.mxu0 %v71
    %v142 = vpop.f32.mrf.mxu0
    %v143 = vadd.f32 0.0, %v142
    %v144 = vpop.f32.mrf.mxu0
    %145 = vmatprep.mubr.f32.mxu0 0.0
    %146 = vmatmul.mubr.f32.gmra.mxu0 %v74
    %v147 = vpop.f32.mrf.mxu0
    %v148 = vadd.f32 0.0, %v147
    %v149 = vpop.f32.mrf.mxu0
    %150 = vdwg.mxu0
    %vm151 = vcmask 261120
    %v153 = vsel %vm151, %v59, 0
    %v156 = vsel %vm151, %v60, 0
    %158 = vmatprep.subr.mxu0 0.0
    %159 = vmatpush1.msra.mxu0 0.0
    %160 = vmatprep.subr.mxu0 0.0
    %161 = vmatpush1.msra.mxu0 0.0
    %162 = vmatprep.subr.mxu0 0.0
    %163 = vmatpush1.msra.mxu0 0.0
    %164 = vmatprep.subr.mxu0 0.0
    %165 = vmatpush1.msra.mxu0 0.0
    %166 = vmatprep.subr.mxu0 0.0
    %167 = vmatpush1.msra.mxu0 0.0
    %168 = vmatprep.subr.mxu0 0.0
    %169 = vmatpush1.msra.mxu0 0.0
    %170 = vmatprep.subr.mxu0 0.0
    %171 = vmatpush1.msra.mxu0 0.0
    %172 = vmatprep.subr.mxu0 0.0
    %173 = vmatpush1.msra.mxu0 0.0
    %174 = vmatprep.subr.mxu0 0.0
    %175 = vmatpush1.msra.mxu0 0.0
    %176 = vmatprep.subr.mxu0 0.0
    %177 = vmatpush1.msra.mxu0 0.0
    %178 = vmatprep.subr.mxu0 0.0
    %179 = vmatpush1.msra.mxu0 0.0
    %180 = vmatprep.subr.mxu0 0.0
    %181 = vmatpush1.msra.mxu0 0.0
    %182 = vmatprep.subr.mxu0 0.0
    %183 = vmatpush1.msra.mxu0 %v66
    %184 = vmatprep.subr.mxu0 0.0
    %185 = vmatpush1.msra.mxu0 %v65
    %186 = vmatprep.subr.mxu0 0.0
    %187 = vmatpush1.msra.mxu0 %v64
    %188 = vmatprep.subr.mxu0 0.0
    %189 = vmatpush1.msra.mxu0 %v63
    %190 = vmatprep.subr.mxu0 0.0
    %191 = vmatpush2.msra.mxu0 0.0
    %192 = vmatprep.subr.mxu0 0.0
    %193 = vmatpush2.msra.mxu0 0.0
    %194 = vmatprep.subr.mxu0 0.0
    %195 = vmatpush2.msra.mxu0 0.0
    %196 = vmatprep.subr.mxu0 0.0
    %197 = vmatpush2.msra.mxu0 0.0
    %198 = vmatprep.subr.mxu0 0.0
    %199 = vmatpush2.msra.mxu0 0.0
    %200 = vmatprep.subr.mxu0 0.0
    %201 = vmatpush2.msra.mxu0 0.0
    %202 = vmatprep.subr.mxu0 0.0
    %203 = vmatpush2.msra.mxu0 0.0
    %204 = vmatprep.subr.mxu0 0.0
    %205 = vmatpush2.msra.mxu0 0.0
    %206 = vmatprep.subr.mxu0 0.0
    %207 = vmatpush2.msra.mxu0 0.0
    %208 = vmatprep.subr.mxu0 0.0
    %209 = vmatpush2.msra.mxu0 0.0
    %210 = vmatprep.subr.mxu0 0.0
    %211 = vmatpush2.msra.mxu0 0.0
    %212 = vmatprep.subr.mxu0 0.0
    %213 = vmatpush2.msra.mxu0 0.0
    %214 = vmatprep.subr.mxu0 0.0
    %215 = vmatpush2.msra.mxu0 0.0
    %216 = vmatprep.subr.mxu0 0.0
    %217 = vmatpush2.msra.mxu0 0.0
    %218 = vmatprep.subr.mxu0 0.0
    %219 = vmatpush2.msra.mxu0 0.0
    %220 = vmatprep.subr.mxu0 0.0
    %221 = vmatpush2.msra.mxu0 0.0
    %222 = vmatprep.mubr.f32.mxu0 0.0
    %223 = vmatmul.mubr.f32.gmra.mxu0 %v153
    %v224 = vpop.f32.mrf.mxu0
    %v225 = vadd.f32 %v143, %v224
    %v226 = vpop.f32.mrf.mxu0
    %227 = vmatprep.mubr.f32.mxu0 0.0
    %228 = vmatmul.mubr.f32.gmra.mxu0 %v156
    %v229 = vpop.f32.mrf.mxu0
    %v230 = vadd.f32 %v148, %v229
    %v231 = vpop.f32.mrf.mxu0
    %232 = vdwg.mxu0
    %v233 = vld [vmem:[%s3] sm:$0x1]
    %v235 = vlaneseq
    %v236 = vshrl.u32 %v235, 7
    %v237 = vsub.s32 0, %v236
    %v238 = vrot.slane %v233, %v237
    %v240 = vadd.f32 %v225, %v238
    %v241 = vadd.f32 %v230, %v238
    %vm242 = vcmask 523264
    %243 = vst.msk [vmem:[#allocation8] sm:$0xff] %vm242, %v240
    %244 = vst.msk [vmem:[#allocation8 + $0x8] sm:$0xff] %vm242, %v241
    // Predicated region
    $region30: #{tpu_custom_call.1} parent=1 // pred_check
      _
    $region31: #{tpu_custom_call.1} parent=1 // pred_check_branch
      %246 = sbr.rel (0) target = $region33
    $region32: #{tpu_custom_call.1} parent=1 // pred_region
      %s248 = ssub.s32 256, 256
      %249 = vsyncadd [#allocation4], %s248
      %s250 = sshll.u32 [#allocation8], 4
      %s251 = int_to_ptr.vmem [resolvable:$true] %s250
      %256 = dma.vmem_to_hbm [thread:$0]  %s251, 256, %s4, [#allocation4], 128, 128, 8
    $region33: #{tpu_custom_call.1} parent=1 // pred_fallthru
      _
    // Predicated region
    $region34: #{tpu_custom_call.1} parent=1 // pred_check
      _
    $region35: #{tpu_custom_call.1} parent=1 // pred_check_branch
      %258 = sbr.rel (0) target = $region37
    $region36: #{tpu_custom_call.1} parent=1 // pred_region
      %259 = dma.done [#allocation4], 256
    $region37: #{tpu_custom_call.1} parent=1 // pred_fallthru
      _
    %260 = vsyncpa [#allocation3], 1
    %261 = vsyncpa [#allocation6], 1
    %262 = vsyncpa [#allocation4], 1

// kernel: tpu_custom_call.1
$region0: #{tpu_custom_call.1}
  #allocation0 [shape = 'u32[]', space=smem, size = 0x4, offset = 0x4, fixed_abs, tag = 'smem constant byte address 0x4 - core index']
  #allocation1 [shape = 'u32[144,128]{1,0:T(1,128)}', space=vmem, size = 0x12000, scoped, tag = 'internal scratch']
  %s0 = inlined_call_operand.hbm [shape: f32[16,32], index: 0, kind: input, shape index: {}]
  %s1 = inlined_call_operand.hbm [shape: f32[16,16], index: 1, kind: input, shape index: {}]
  %s2 = inlined_call_operand.hbm [shape: f32[48,64], index: 2, kind: input, shape index: {}]
  %s3 = inlined_call_operand.vmem [shape: f32[1,64], index: 3, kind: input, shape index: {}]
  %s4 = inlined_call_operand.hbm [shape: f32[16,64], index: 4, kind: output, shape index: {}]
  %s5 = sld [smem:[#allocation0]]
  $region38: #{tpu_custom_call.1} parent=0
    _
  %s7 = ssub.s32 1, %s5
  %s8 = scalar_select 0, %s7, %s5
  $region1: #{tpu_custom_call.1} parent=0
    #allocation2 [shape = 'u8[8192]{0}', space=vmem, size = 0x2000, scoped, tag = 'input window, operand 0, single buffered']
    #allocation3 [shape = 's32[1]{0}', space=sflag, size = 0x4, scoped, tag = 'scoped memory for tpu_custom_call.1']
    #allocation4 [shape = 's32[1]{0}', space=sflag, size = 0x4, scoped, tag = 'scoped memory for tpu_custom_call.1']
    #allocation5 [shape = 'u8[8192]{0}', space=vmem, size = 0x2000, scoped, tag = 'input window, operand 1, single buffered']
    #allocation6 [shape = 's32[1]{0}', space=sflag, size = 0x4, scoped, tag = 'scoped memory for tpu_custom_call.1']
    #allocation7 [shape = 'u8[24576]{0}', space=vmem, size = 0x6000, scoped, tag = 'input window, operand 2, single buffered']
    #allocation8 [shape = 'u8[8192]{0}', space=vmem, size = 0x2000, scoped, tag = 'output window, operand 0, single buffered']
    %9 = vsyncpa [#allocation3], 0
    %10 = vsyncpa [#allocation6], 0
    %11 = vsyncpa [#allocation4], 0
    // Predicated region
    $region2: #{tpu_custom_call.1} parent=1 // pred_check
      _
    $region3: #{tpu_custom_call.1} parent=1 // pred_check_branch
      %13 = sbr.rel (0) target = $region5
    $region4: #{tpu_custom_call.1} parent=1 // pred_region
      %s15 = ssub.s32 256, 256
      %16 = vsyncadd [#allocation3], %s15
      %s17 = sshll.u32 [#allocation2], 4
      %s18 = int_to_ptr.vmem [resolvable:$true] %s17
      %23 = dma.hbm_to_vmem [thread:$0]  %s0, 256, %s18, [#allocation3], 128, 128, 8
    $region5: #{tpu_custom_call.1} parent=1 // pred_fallthru
      _
    // Predicated region
    $region6: #{tpu_custom_call.1} parent=1 // pred_check
      _
    $region7: #{tpu_custom_call.1} parent=1 // pred_check_branch
      %25 = sbr.rel (0) target = $region9
    $region8: #{tpu_custom_call.1} parent=1 // pred_region
      %s27 = ssub.s32 256, 256
      %28 = vsyncadd [#allocation6], %s27
      %s29 = sshll.u32 [#allocation5], 4
      %s30 = int_to_ptr.vmem [resolvable:$true] %s29
      %35 = dma.hbm_to_vmem [thread:$0]  %s1, 256, %s30, [#allocation6], 128, 128, 8
    $region9: #{tpu_custom_call.1} parent=1 // pred_fallthru
      _
    // Predicated region
    $region10: #{tpu_custom_call.1} parent=1 // pred_check
      _
    $region11: #{tpu_custom_call.1} parent=1 // pred_check_branch
      %37 = sbr.rel (0) target = $region13
    $region12: #{tpu_custom_call.1} parent=1 // pred_region
      %s39 = ssub.s32 768, 768
      %40 = vsyncadd [#allocation6], %s39
      %s41 = sshll.u32 [#allocation7], 4
      %s42 = int_to_ptr.vmem [resolvable:$true] %s41
      %47 = dma.hbm_to_vmem [thread:$0]  %s2, 768, %s42, [#allocation6], 128, 128, 8
    $region13: #{tpu_custom_call.1} parent=1 // pred_fallthru
      _
    // Predicated region
    $region14: #{tpu_custom_call.1} parent=1 // pred_check
      _
    $region15: #{tpu_custom_call.1} parent=1 // pred_check_branch
      %49 = sbr.rel (0) target = $region17
    $region16: #{tpu_custom_call.1} parent=1 // pred_region
      _
    $region17: #{tpu_custom_call.1} parent=1 // pred_fallthru
      _
    // Predicated region
    $region18: #{tpu_custom_call.1} parent=1 // pred_check
      _
    $region19: #{tpu_custom_call.1} parent=1 // pred_check_branch
      %51 = sbr.rel (0) target = $region21
    $region20: #{tpu_custom_call.1} parent=1 // pred_region
      %52 = dma.done [#allocation3], 256
    $region21: #{tpu_custom_call.1} parent=1 // pred_fallthru
      _
    // Predicated region
    $region22: #{tpu_custom_call.1} parent=1 // pred_check
      _
    $region23: #{tpu_custom_call.1} parent=1 // pred_check_branch
      %54 = sbr.rel (0) target = $region25
    $region24: #{tpu_custom_call.1} parent=1 // pred_region
      %55 = dma.done [#allocation6], 256
    $region25: #{tpu_custom_call.1} parent=1 // pred_fallthru
      _
    // Predicated region
    $region26: #{tpu_custom_call.1} parent=1 // pred_check
      _
    $region27: #{tpu_custom_call.1} parent=1 // pred_check_branch
      %57 = sbr.rel (0) target = $region29
    $region28: #{tpu_custom_call.1} parent=1 // pred_region
      %58 = dma.done [#allocation6], 768
    $region29: #{tpu_custom_call.1} parent=1 // pred_fallthru
      _
    %v59 = vld [vmem:[#allocation2] sm:$0xff]
    %v60 = vld [vmem:[#allocation2 + $0x8] sm:$0xff]
    %v61 = vld [vmem:[#allocation5] sm:$0xff]
    %v62 = vld [vmem:[#allocation5 + $0x8] sm:$0xff]
    %v63 = vld [vmem:[#allocation7] sm:$0xff]
    %v64 = vld [vmem:[#allocation7 + $0x8] sm:$0xff]
    %v65 = vld [vmem:[#allocation7 + $0x10] sm:$0xff]
    %v66 = vld [vmem:[#allocation7 + $0x18] sm:$0xff]
    %v67 = vld [vmem:[#allocation7 + $0x20] sm:$0xff]
    %v68 = vld [vmem:[#allocation7 + $0x28] sm:$0xff]
    %vm69 = vcmask 130048
    %v71 = vsel %vm69, %v61, 0
    %v74 = vsel %vm69, %v62, 0
    %76 = vmatprep.subr.mxu0 0.0
    %77 = vmatpush1.msra.mxu0 0.0
    %78 = vmatprep.subr.mxu0 0.0
    %79 = vmatpush1.msra.mxu0 0.0
    %80 = vmatprep.subr.mxu0 0.0
    %81 = vmatpush1.msra.mxu0 0.0
    %82 = vmatprep.subr.mxu0 0.0
    %83 = vmatpush1.msra.mxu0 0.0
    %84 = vmatprep.subr.mxu0 0.0
    %85 = vmatpush1.msra.mxu0 0.0
    %86 = vmatprep.subr.mxu0 0.0
    %87 = vmatpush1.msra.mxu0 0.0
    %88 = vmatprep.subr.mxu0 0.0
    %89 = vmatpush1.msra.mxu0 0.0
    %90 = vmatprep.subr.mxu0 0.0
    %91 = vmatpush1.msra.mxu0 0.0
    %92 = vmatprep.subr.mxu0 0.0
    %93 = vmatpush1.msra.mxu0 0.0
    %94 = vmatprep.subr.mxu0 0.0
    %95 = vmatpush1.msra.mxu0 0.0
    %96 = vmatprep.subr.mxu0 0.0
    %97 = vmatpush1.msra.mxu0 0.0
    %98 = vmatprep.subr.mxu0 0.0
    %99 = vmatpush1.msra.mxu0 0.0
    %100 = vmatprep.subr.mxu0 0.0
    %101 = vmatpush1.msra.mxu0 0.0
    %102 = vmatprep.subr.mxu0 0.0
    %103 = vmatpush1.msra.mxu0 0.0
    %104 = vmatprep.subr.mxu0 0.0
    %105 = vmatpush1.msra.mxu0 %v68
    %106 = vmatprep.subr.mxu0 0.0
    %107 = vmatpush1.msra.mxu0 %v67
    %108 = vmatprep.subr.mxu0 0.0
    %109 = vmatpush2.msra.mxu0 0.0
    %110 = vmatprep.subr.mxu0 0.0
    %111 = vmatpush2.msra.mxu0 0.0
    %112 = vmatprep.subr.mxu0 0.0
    %113 = vmatpush2.msra.mxu0 0.0
    %114 = vmatprep.subr.mxu0 0.0
    %115 = vmatpush2.msra.mxu0 0.0
    %116 = vmatprep.subr.mxu0 0.0
    %117 = vmatpush2.msra.mxu0 0.0
    %118 = vmatprep.subr.mxu0 0.0
    %119 = vmatpush2.msra.mxu0 0.0
    %120 = vmatprep.subr.mxu0 0.0
    %121 = vmatpush2.msra.mxu0 0.0
    %122 = vmatprep.subr.mxu0 0.0
    %123 = vmatpush2.msra.mxu0 0.0
    %124 = vmatprep.subr.mxu0 0.0
    %125 = vmatpush2.msra.mxu0 0.0
    %126 = vmatprep.subr.mxu0 0.0
    %127 = vmatpush2.msra.mxu0 0.0
    %128 = vmatprep.subr.mxu0 0.0
    %129 = vmatpush2.msra.mxu0 0.0
    %130 = vmatprep.subr.mxu0 0.0
    %131 = vmatpush2.msra.mxu0 0.0
    %132 = vmatprep.subr.mxu0 0.0
    %133 = vmatpush2.msra.mxu0 0.0
    %134 = vmatprep.subr.mxu0 0.0
    %135 = vmatpush2.msra.mxu0 0.0
    %136 = vmatprep.subr.mxu0 0.0
    %137 = vmatpush2.msra.mxu0 0.0
    %138 = vmatprep.subr.mxu0 0.0
    %139 = vmatpush2.msra.mxu0 0.0
    %140 = vmatprep.mubr.f32.mxu0 0.0
    %141 = vmatmul.mubr.f32.gmra.mxu0 %v71
    %v142 = vpop.f32.mrf.mxu0
    %v143 = vadd.f32 0.0, %v142
    %v144 = vpop.f32.mrf.mxu0
    %145 = vmatprep.mubr.f32.mxu0 0.0
    %146 = vmatmul.mubr.f32.gmra.mxu0 %v74
    %v147 = vpop.f32.mrf.mxu0
    %v148 = vadd.f32 0.0, %v147
    %v149 = vpop.f32.mrf.mxu0
    %150 = vdwg.mxu0
    %vm151 = vcmask 261120
    %v153 = vsel %vm151, %v59, 0
    %v156 = vsel %vm151, %v60, 0
    %158 = vmatprep.subr.mxu0 0.0
    %159 = vmatpush1.msra.mxu0 0.0
    %160 = vmatprep.subr.mxu0 0.0
    %161 = vmatpush1.msra.mxu0 0.0
    %162 = vmatprep.subr.mxu0 0.0
    %163 = vmatpush1.msra.mxu0 0.0
    %164 = vmatprep.subr.mxu0 0.0
    %165 = vmatpush1.msra.mxu0 0.0
    %166 = vmatprep.subr.mxu0 0.0
    %167 = vmatpush1.msra.mxu0 0.0
    %168 = vmatprep.subr.mxu0 0.0
    %169 = vmatpush1.msra.mxu0 0.0
    %170 = vmatprep.subr.mxu0 0.0
    %171 = vmatpush1.msra.mxu0 0.0
    %172 = vmatprep.subr.mxu0 0.0
    %173 = vmatpush1.msra.mxu0 0.0
    %174 = vmatprep.subr.mxu0 0.0
    %175 = vmatpush1.msra.mxu0 0.0
    %176 = vmatprep.subr.mxu0 0.0
    %177 = vmatpush1.msra.mxu0 0.0
    %178 = vmatprep.subr.mxu0 0.0
    %179 = vmatpush1.msra.mxu0 0.0
    %180 = vmatprep.subr.mxu0 0.0
    %181 = vmatpush1.msra.mxu0 0.0
    %182 = vmatprep.subr.mxu0 0.0
    %183 = vmatpush1.msra.mxu0 %v66
    %184 = vmatprep.subr.mxu0 0.0
    %185 = vmatpush1.msra.mxu0 %v65
    %186 = vmatprep.subr.mxu0 0.0
    %187 = vmatpush1.msra.mxu0 %v64
    %188 = vmatprep.subr.mxu0 0.0
    %189 = vmatpush1.msra.mxu0 %v63
    %190 = vmatprep.subr.mxu0 0.0
    %191 = vmatpush2.msra.mxu0 0.0
    %192 = vmatprep.subr.mxu0 0.0
    %193 = vmatpush2.msra.mxu0 0.0
    %194 = vmatprep.subr.mxu0 0.0
    %195 = vmatpush2.msra.mxu0 0.0
    %196 = vmatprep.subr.mxu0 0.0
    %197 = vmatpush2.msra.mxu0 0.0
    %198 = vmatprep.subr.mxu0 0.0
    %199 = vmatpush2.msra.mxu0 0.0
    %200 = vmatprep.subr.mxu0 0.0
    %201 = vmatpush2.msra.mxu0 0.0
    %202 = vmatprep.subr.mxu0 0.0
    %203 = vmatpush2.msra.mxu0 0.0
    %204 = vmatprep.subr.mxu0 0.0
    %205 = vmatpush2.msra.mxu0 0.0
    %206 = vmatprep.subr.mxu0 0.0
    %207 = vmatpush2.msra.mxu0 0.0
    %208 = vmatprep.subr.mxu0 0.0
    %209 = vmatpush2.msra.mxu0 0.0
    %210 = vmatprep.subr.mxu0 0.0
    %211 = vmatpush2.msra.mxu0 0.0
    %212 = vmatprep.subr.mxu0 0.0
    %213 = vmatpush2.msra.mxu0 0.0
    %214 = vmatprep.subr.mxu0 0.0
    %215 = vmatpush2.msra.mxu0 0.0
    %216 = vmatprep.subr.mxu0 0.0
    %217 = vmatpush2.msra.mxu0 0.0
    %218 = vmatprep.subr.mxu0 0.0
    %219 = vmatpush2.msra.mxu0 0.0
    %220 = vmatprep.subr.mxu0 0.0
    %221 = vmatpush2.msra.mxu0 0.0
    %222 = vmatprep.mubr.f32.mxu0 0.0
    %223 = vmatmul.mubr.f32.gmra.mxu0 %v153
    %v224 = vpop.f32.mrf.mxu0
    %v225 = vadd.f32 %v143, %v224
    %v226 = vpop.f32.mrf.mxu0
    %227 = vmatprep.mubr.f32.mxu0 0.0
    %228 = vmatmul.mubr.f32.gmra.mxu0 %v156
    %v229 = vpop.f32.mrf.mxu0
    %v230 = vadd.f32 %v148, %v229
    %v231 = vpop.f32.mrf.mxu0
    %232 = vdwg.mxu0
    %v233 = vld [vmem:[%s3] sm:$0x1]
    %v235 = vlaneseq
    %v236 = vshrl.u32 %v235, 7
    %v237 = vsub.s32 0, %v236
    %v238 = vrot.slane %v233, %v237
    %v240 = vadd.f32 %v225, %v238
    %v241 = vadd.f32 %v230, %v238
    %vm242 = vcmask 523264
    %243 = vst.msk [vmem:[#allocation8] sm:$0xff] %vm242, %v240
    %244 = vst.msk [vmem:[#allocation8 + $0x8] sm:$0xff] %vm242, %v241
    // Predicated region
    $region30: #{tpu_custom_call.1} parent=1 // pred_check
      _
    $region31: #{tpu_custom_call.1} parent=1 // pred_check_branch
      %246 = sbr.rel (0) target = $region33
    $region32: #{tpu_custom_call.1} parent=1 // pred_region
      %s248 = ssub.s32 256, 256
      %249 = vsyncadd [#allocation4], %s248
      %s250 = sshll.u32 [#allocation8], 4
      %s251 = int_to_ptr.vmem [resolvable:$true] %s250
      %256 = dma.vmem_to_hbm [thread:$0]  %s251, 256, %s4, [#allocation4], 128, 128, 8
    $region33: #{tpu_custom_call.1} parent=1 // pred_fallthru
      _
    // Predicated region
    $region34: #{tpu_custom_call.1} parent=1 // pred_check
      _
    $region35: #{tpu_custom_call.1} parent=1 // pred_check_branch
      %258 = sbr.rel (0) target = $region37
    $region36: #{tpu_custom_call.1} parent=1 // pred_region
      %259 = dma.done [#allocation4], 256
    $region37: #{tpu_custom_call.1} parent=1 // pred_fallthru
      _
    %260 = vsyncpa [#allocation3], 1
    %261 = vsyncpa [#allocation6], 1
    %262 = vsyncpa [#allocation4], 1

</llo_original>
